<compile_context>
chip_gen: v6e
topology: v6e:2x2x1
jax: 0.10.0
libtpu: 0.0.40
codegen_flags: <defaults>
</compile_context>

<pallas_src>
import jax
import jax.numpy as jnp
from jax.experimental import pallas as pl
from jax.experimental.pallas import tpu as pltpu
import numpy as np


def _round_up(x, m):
    return ((x + m - 1) // m) * m


def _choose_row_tile(n_rows, block_n):
    """Row tile: multiple of 16 (bf16 sublane packing); multiple of 128 whenever
    there is more than one tile (keeps the [1, tm] output rows lane-dense); and
    >= 2 tiles once N >= 1024 so both v7x TensorCores get work (no-op cost on
    v5e/v6e)."""
    block_n = max(128, _round_up(block_n, 128))
    if n_rows < 1024 and n_rows <= block_n:
        return _round_up(max(n_rows, 1), 16)            # single tile, tm == padded N
    half = _round_up(-(-n_rows // 2), 128)              # >= 2 lane-dense tiles
    return min(block_n, half)


def _vmem_budget_bytes():
    """Usable VMEM derived from the actual chip generation (not hard-coded)."""
    try:
        cap = getattr(pltpu.get_tpu_info(), "vmem_capacity_bytes", None)
        if cap:
            return max(int(cap) - (8 << 20), 16 << 20)  # leave compiler headroom
    except Exception:
        pass
    return 56 << 20                                     # conservative (v7x: 64 MiB/TC)


def prepare_params(w1, b1, w2, b2):
    """One-time conversion of the Linear params into the kernel layout.

    w1: [D, D] stored [in, out]; b1: [D]; w2: [D, 1]; b2: [1].
    Returns (w1 bf16 [D, D], b1 f32 [1, D], w2 f32 [1, D], b2 f32 [1]).
    Call once at load time and reuse across grasp_depth calls.
    """
    D = w1.shape[0]
    w1_p = w1.astype(jnp.bfloat16)
    b1_row = jnp.asarray(b1, jnp.float32).reshape(1, D)
    w2_row = jnp.asarray(w2, jnp.float32).reshape(1, D)
    b2_s = jnp.asarray(b2, jnp.float32).reshape(1)
    return w1_p, b1_row, w2_row, b2_s


def grasp_depth_kernel(x_ref, w1_ref, b1_ref, w2_ref, b2_ref, o_ref):
    # x_ref:  [TM, D]  streamed feats tile (cast to bf16 in-kernel)
    # w1_ref: [D, D]   resident layer-1 weight ([in, out], bf16)
    # b1_ref: [1, D]   resident layer-1 bias row (f32)
    # w2_ref: [1, D]   resident layer-2 weight row (f32)
    # b2_ref: (1,)     layer-2 bias scalar in SMEM (f32)
    # o_ref:  [1, TM]  lane-dense output row
    x = x_ref[...].astype(jnp.bfloat16)
    # Layer 1 on the MXU, f32 accumulation.
    h = jnp.dot(x, w1_ref[...], preferred_element_type=jnp.float32) + b1_ref[...]
    # F.leaky_relu default negative_slope = 0.01 (VPU).
    h = jnp.where(h > 0, h, 0.01 * h)
    # Layer 2 as VPU multiply + XLU lane reduction (avoids a 1-column MXU pass).
    out = jnp.sum(h * w2_ref[...], axis=-1) + b2_ref[0]          # [TM]
    o_ref[...] = out.reshape(1, -1).astype(o_ref.dtype)          # lane-dense row


def grasp_depth(feats, w1, b1_row, w2_row, b2_s, *, block_n=1024):
    """feats: [..., D]; params as returned by prepare_params(). Returns [..., 1]."""
    lead = feats.shape[:-1]
    D = feats.shape[-1]
    feats2d = feats.reshape(-1, D)          # no copy for the usual [N, D] case
    N = feats2d.shape[0]
    out_dtype = feats.dtype

    # Shape-only normalization (dtype/layout prep is hoisted to prepare_params).
    b1_row = jnp.asarray(b1_row).reshape(1, D)
    w2_row = jnp.asarray(w2_row).reshape(1, D)
    b2_s = jnp.asarray(b2_s).reshape(1)

    tm = _choose_row_tile(N, block_n)
    num_tiles = -(-N // tm)
    n_pad = num_tiles * tm                  # only the (tiny) output row is padded

    in_b = jnp.dtype(feats.dtype).itemsize
    out_b = jnp.dtype(out_dtype).itemsize
    w1_b = D * D * jnp.dtype(w1.dtype).itemsize

    # Actual VMEM buffer sum: 2x feats tile (pipeline) + single-copy resident
    # weights + in-kernel bf16 cast / f32 intermediates + 2x [1, tm] out rows.
    est = (2 * tm * D * in_b + w1_b + 2 * D * 4
           + tm * D * (2 + 4 + 4) + 2 * tm * out_b + (1 << 20))
    vmem_limit = int(min(max(est, 32 << 20), _vmem_budget_bytes()))

    cost = pl.CostEstimate(
        flops=2 * N * D * D + 4 * N * D,
        transcendentals=0,
        bytes_accessed=N * D * in_b + w1_b + 2 * D * 4 + 4 + N * out_b,
    )

    out_row = pl.pallas_call(
        grasp_depth_kernel,
        out_shape=jax.ShapeDtypeStruct((1, n_pad), out_dtype),
        grid=(num_tiles,),
        in_specs=[
            pl.BlockSpec((tm, D), lambda i: (i, 0)),             # streamed feats tiles
            pl.BlockSpec(memory_space=pltpu.MemorySpace.VMEM),   # resident w1 (1 copy)
            pl.BlockSpec(memory_space=pltpu.MemorySpace.VMEM),   # resident b1 row
            pl.BlockSpec(memory_space=pltpu.MemorySpace.VMEM),   # resident w2 row
            pl.BlockSpec(memory_space=pltpu.MemorySpace.SMEM),   # b2 scalar
        ],
        out_specs=pl.BlockSpec((1, tm), lambda i: (0, i)),       # lane-dense rows
        compiler_params=pltpu.CompilerParams(
            dimension_semantics=("parallel",),
            vmem_limit_bytes=vmem_limit,
        ),
        cost_estimate=cost,
    )(feats2d, w1, b1_row, w2_row, b2_s)

    return out_row[0, :N].reshape(*lead, 1)


def init_params(key, feat_dim):
    """Deterministic init mimicking PyTorch nn.Linear defaults (uniform +-1/sqrt(fan_in))."""
    k1, k2, k3, k4 = jax.random.split(key, 4)
    bound = 1.0 / np.sqrt(feat_dim)
    # stored already transposed vs PyTorch: [in, out]
    w1 = jax.random.uniform(k1, (feat_dim, feat_dim), jnp.float32, -bound, bound)
    b1 = jax.random.uniform(k2, (feat_dim,), jnp.float32, -bound, bound)
    w2 = jax.random.uniform(k3, (feat_dim, 1), jnp.float32, -bound, bound)
    b2 = jax.random.uniform(k4, (1,), jnp.float32, -bound, bound)
    return w1, b1, w2, b2


def reference(feats, w1, b1, w2, b2):
    h = feats @ w1 + b1
    h = jnp.where(h > 0, h, 0.01 * h)
    return h @ w2 + b2


if __name__ == "__main__":
    key = jax.random.PRNGKey(0)
    k_feats, k_params = jax.random.split(key)

    N, feat_dim = 16, 32
    feats = jax.random.normal(k_feats, (N, feat_dim), jnp.float32)
    w1, b1, w2, b2 = init_params(k_params, feat_dim)

    # Weight prep (bf16 cast + row layout) is done ONCE, outside the hot path.
    params = prepare_params(w1, b1, w2, b2)

    out = grasp_depth(feats, *params)
    jax.block_until_ready(out)

    ref = reference(feats, w1, b1, w2, b2)
    # bf16 MXU operands with f32 accumulation -> relaxed tolerance vs f32 reference.
    np.testing.assert_allclose(np.asarray(out), np.asarray(ref), rtol=2e-2, atol=2e-2)
    assert out.shape == (N, 1)
    print("KERNEL_OK")
</pallas_src>

<mosaic_0001>
module attributes {stable_mosaic.version = 11 : i64} {
  func.func @grasp_depth_kernel(%arg0: i32, %arg1: memref<16x32xf32, #tpu.memory_space<vmem>>, %arg2: memref<32x32xbf16, #tpu.memory_space<vmem>>, %arg3: memref<1x32xf32, #tpu.memory_space<vmem>>, %arg4: memref<1x32xf32, #tpu.memory_space<vmem>>, %arg5: memref<1xf32, #tpu.memory_space<smem>>, %arg6: memref<1x16xf32, #tpu.memory_space<vmem>>) attributes {dimension_semantics = [#tpu.dimension_semantics<parallel>], iteration_bounds = array<i64: 1>, scalar_prefetch = 0 : i64, scratch_operands = 0 : i64, tpu.core_type = #tpu.core_type<tc>, window_params = [{transform_indices = @transform_0, window_bounds = array<i64: 16, 32>}, {pipeline_mode = #tpu.pipeline_mode<synchronous>, transform_indices = @transform_1, window_bounds = array<i64: 32, 32>}, {pipeline_mode = #tpu.pipeline_mode<synchronous>, transform_indices = @transform_2, window_bounds = array<i64: 1, 32>}, {pipeline_mode = #tpu.pipeline_mode<synchronous>, transform_indices = @transform_3, window_bounds = array<i64: 1, 32>}, {transform_indices = @transform_4, window_bounds = array<i64: 1>}, {transform_indices = @transform_5, window_bounds = array<i64: 1, 16>}]} {
    %c0 = arith.constant 0 : index
    %c0_0 = arith.constant 0 : index
    %0 = vector.load %arg1[%c0, %c0_0] : memref<16x32xf32, #tpu.memory_space<vmem>>, vector<16x32xf32>
    %1 = arith.truncf %0 : vector<16x32xf32> to vector<16x32xbf16>
    %c0_1 = arith.constant 0 : index
    %c0_2 = arith.constant 0 : index
    %2 = vector.load %arg2[%c0_1, %c0_2] : memref<32x32xbf16, #tpu.memory_space<vmem>>, vector<32x32xbf16>
    %cst = arith.constant dense<0.000000e+00> : vector<16x32xf32>
    %3 = tpu.matmul %1, %2, %cst {dimension_numbers = #tpu.dot_dimension_numbers<[1], [0], [0], [1], [0, 0, 1, 1], [], []>} : vector<16x32xbf16>, vector<32x32xbf16>, vector<16x32xf32> -> vector<16x32xf32>
    %c0_3 = arith.constant 0 : index
    %c0_4 = arith.constant 0 : index
    %4 = vector.load %arg3[%c0_3, %c0_4] : memref<1x32xf32, #tpu.memory_space<vmem>>, vector<1x32xf32>
    %5 = vector.broadcast %4 : vector<1x32xf32> to vector<16x32xf32>
    %6 = arith.addf %3, %5 : vector<16x32xf32>
    %cst_5 = arith.constant 0.000000e+00 : f32
    %7 = vector.broadcast %cst_5 : f32 to vector<16x32xf32>
    %8 = arith.cmpf ogt, %6, %7 : vector<16x32xf32>
    %cst_6 = arith.constant 0.00999999977 : f32
    %9 = vector.broadcast %cst_6 : f32 to vector<16x32xf32>
    %10 = arith.mulf %9, %6 : vector<16x32xf32>
    %11 = arith.select %8, %6, %10 : vector<16x32xi1>, vector<16x32xf32>
    %c0_7 = arith.constant 0 : index
    %c0_8 = arith.constant 0 : index
    %12 = vector.load %arg4[%c0_7, %c0_8] : memref<1x32xf32, #tpu.memory_space<vmem>>, vector<1x32xf32>
    %13 = vector.broadcast %12 : vector<1x32xf32> to vector<16x32xf32>
    %14 = arith.mulf %11, %13 : vector<16x32xf32>
    %cst_9 = arith.constant dense<0.000000e+00> : vector<16xf32>
    %15 = vector.multi_reduction <add>, %14, %cst_9 [1] : vector<16x32xf32> to vector<16xf32>
    %c0_10 = arith.constant 0 : index
    %16 = memref.load %arg5[%c0_10] : memref<1xf32, #tpu.memory_space<smem>>
    %17 = vector.broadcast %16 : f32 to vector<16xf32>
    %18 = arith.addf %15, %17 : vector<16xf32>
    %19 = vector.shape_cast %18 : vector<16xf32> to vector<1x16xf32>
    %c0_11 = arith.constant 0 : index
    %c0_12 = arith.constant 0 : index
    %20 = vector.load %arg6[%c0_11, %c0_12] : memref<1x16xf32, #tpu.memory_space<vmem>>, vector<1x16xf32>
    tpu.vector_store %arg6[%c0_11, %c0_12], %19 {strides = array<i32>} : memref<1x16xf32, #tpu.memory_space<vmem>>, vector<1x16xf32>,
    return
  }
  func.func @transform_0(%arg0: i32) -> (i32, i32) {
    %c0_i32 = arith.constant 0 : i32
    %c0_i32_0 = arith.constant 0 : i32
    return %arg0, %c0_i32 : i32, i32
  }
  func.func @transform_1(%arg0: i32) -> (i32, i32) {
    %c0_i32 = arith.constant 0 : i32
    %c0_i32_0 = arith.constant 0 : i32
    %c0_i32_1 = arith.constant 0 : i32
    return %c0_i32, %c0_i32_0 : i32, i32
  }
  func.func @transform_2(%arg0: i32) -> (i32, i32) {
    %c0_i32 = arith.constant 0 : i32
    %c0_i32_0 = arith.constant 0 : i32
    %c0_i32_1 = arith.constant 0 : i32
    return %c0_i32, %c0_i32_0 : i32, i32
  }
  func.func @transform_3(%arg0: i32) -> (i32, i32) {
    %c0_i32 = arith.constant 0 : i32
    %c0_i32_0 = arith.constant 0 : i32
    %c0_i32_1 = arith.constant 0 : i32
    return %c0_i32, %c0_i32_0 : i32, i32
  }
  func.func @transform_4(%arg0: i32) -> i32 {
    %c0_i32 = arith.constant 0 : i32
    %c0_i32_0 = arith.constant 0 : i32
    return %c0_i32 : i32
  }
  func.func @transform_5(%arg0: i32) -> (i32, i32) {
    %c0_i32 = arith.constant 0 : i32
    %c0_i32_0 = arith.constant 0 : i32
    return %c0_i32, %arg0 : i32, i32
  }
}

</mosaic_0001>

<llo_original>
// kernel: tpu_custom_call.1
$region0: #{tpu_custom_call.1}
  #allocation0 [shape = 'u32[]', space=smem, size = 0x4, offset = 0x4, fixed_abs, tag = 'smem constant byte address 0x4 - core index']
  #allocation1 [shape = 'u32[144,128]{1,0:T(1,128)}', space=vmem, size = 0x12000, scoped, tag = 'internal scratch']
  #allocation2 [shape = 'f32[1]{0:T(128)S(6)}', space=smem, size = 0x200, scoped, tag = 'scoped memory for tpu_custom_call.1']
  %s0 = inlined_call_operand.hbm [shape: f32[16,32], index: 0, kind: input, shape index: {}]
  %s1 = inlined_call_operand.hbm [shape: bf16[32,32], index: 1, kind: input, shape index: {}]
  %s2 = inlined_call_operand.vmem [shape: f32[1,32], index: 2, kind: input, shape index: {}]
  %s3 = inlined_call_operand.vmem [shape: f32[1,32], index: 3, kind: input, shape index: {}]
  %s4 = inlined_call_operand.<no memory space> [shape: f32[1], index: 4, kind: input, shape index: {}]
  %s5 = inlined_call_operand.hbm [shape: f32[1,16], index: 5, kind: output, shape index: {}]
  %s6 = sld [smem:[#allocation0]]
  $region38: #{tpu_custom_call.1} parent=0
    _
  %s8 = ssub.s32 1, %s6
  %s9 = scalar_select 0, %s8, %s6
  %10 = sst [smem:[#allocation2]] %s4
  $region1: #{tpu_custom_call.1} parent=0
    #allocation3 [shape = 'u8[8192]{0}', space=vmem, size = 0x2000, scoped, tag = 'input window, operand 0, single buffered']
    #allocation4 [shape = 's32[1]{0}', space=sflag, size = 0x4, scoped, tag = 'scoped memory for tpu_custom_call.1']
    #allocation5 [shape = 's32[1]{0}', space=sflag, size = 0x4, scoped, tag = 'scoped memory for tpu_custom_call.1']
    #allocation6 [shape = 'u8[8192]{0}', space=vmem, size = 0x2000, scoped, tag = 'input window, operand 1, single buffered']
    #allocation7 [shape = 's32[1]{0}', space=sflag, size = 0x4, scoped, tag = 'scoped memory for tpu_custom_call.1']
    #allocation8 [shape = 'u8[512]{0}', space=vmem, size = 0x400, scoped, tag = 'output window, operand 0, single buffered']
    %11 = vsyncpa [#allocation4], 0
    %12 = vsyncpa [#allocation7], 0
    %13 = vsyncpa [#allocation5], 0
    // Predicated region
    $region2: #{tpu_custom_call.1} parent=1 // pred_check
      _
    $region3: #{tpu_custom_call.1} parent=1 // pred_check_branch
      %15 = sbr.rel (0) target = $region5
    $region4: #{tpu_custom_call.1} parent=1 // pred_region
      %s17 = ssub.s32 256, 256
      %18 = vsyncadd [#allocation4], %s17
      %s19 = sshll.u32 [#allocation3], 4
      %s20 = int_to_ptr.vmem [resolvable:$true] %s19
      %25 = dma.hbm_to_vmem [thread:$0]  %s0, 256, %s20, [#allocation4], 128, 128, 8
    $region5: #{tpu_custom_call.1} parent=1 // pred_fallthru
      _
    // Predicated region
    $region6: #{tpu_custom_call.1} parent=1 // pred_check
      _
    $region7: #{tpu_custom_call.1} parent=1 // pred_check_branch
      %27 = sbr.rel (0) target = $region9
    $region8: #{tpu_custom_call.1} parent=1 // pred_region
      %s29 = ssub.s32 256, 256
      %30 = vsyncadd [#allocation7], %s29
      %s31 = sshll.u32 [#allocation6], 4
      %s32 = int_to_ptr.vmem [resolvable:$true] %s31
      %37 = dma.hbm_to_vmem [thread:$0]  %s1, 256, %s32, [#allocation7], 64, 64, 4
    $region9: #{tpu_custom_call.1} parent=1 // pred_fallthru
      _
    // Predicated region
    $region10: #{tpu_custom_call.1} parent=1 // pred_check
      _
    $region11: #{tpu_custom_call.1} parent=1 // pred_check_branch
      %39 = sbr.rel (0) target = $region13
    $region12: #{tpu_custom_call.1} parent=1 // pred_region
      _
    $region13: #{tpu_custom_call.1} parent=1 // pred_fallthru
      _
    // Predicated region
    $region14: #{tpu_custom_call.1} parent=1 // pred_check
      _
    $region15: #{tpu_custom_call.1} parent=1 // pred_check_branch
      %41 = sbr.rel (0) target = $region17
    $region16: #{tpu_custom_call.1} parent=1 // pred_region
      _
    $region17: #{tpu_custom_call.1} parent=1 // pred_fallthru
      _
    // Predicated region
    $region18: #{tpu_custom_call.1} parent=1 // pred_check
      _
    $region19: #{tpu_custom_call.1} parent=1 // pred_check_branch
      %43 = sbr.rel (0) target = $region21
    $region20: #{tpu_custom_call.1} parent=1 // pred_region
      _
    $region21: #{tpu_custom_call.1} parent=1 // pred_fallthru
      _
    // Predicated region
    $region22: #{tpu_custom_call.1} parent=1 // pred_check
      _
    $region23: #{tpu_custom_call.1} parent=1 // pred_check_branch
      %45 = sbr.rel (0) target = $region25
    $region24: #{tpu_custom_call.1} parent=1 // pred_region
      %46 = dma.done [#allocation4], 256
    $region25: #{tpu_custom_call.1} parent=1 // pred_fallthru
      _
    // Predicated region
    $region26: #{tpu_custom_call.1} parent=1 // pred_check
      _
    $region27: #{tpu_custom_call.1} parent=1 // pred_check_branch
      %48 = sbr.rel (0) target = $region29
    $region28: #{tpu_custom_call.1} parent=1 // pred_region
      %49 = dma.done [#allocation7], 256
    $region29: #{tpu_custom_call.1} parent=1 // pred_fallthru
      _
    %v51 = vld [vmem:[#allocation3] sm:$0xff]
    %v52 = vld [vmem:[#allocation3 + $0x8] sm:$0xff]
    %v53 = vpack.c.bf16 %v52, %v51
    %v54 = vld [vmem:[#allocation6] sm:$0xf]
    %v55 = vld [vmem:[#allocation6 + $0x4] sm:$0xf]
    %v56 = vld [vmem:[#allocation6 + $0x8] sm:$0xf]
    %v57 = vld [vmem:[#allocation6 + $0xc] sm:$0xf]
    %v58 = vld [vmem:[%s2] sm:$0x1]
    %v60 = vlaneseq
    %v61 = vshrl.u32 %v60, 7
    %v62 = vsub.s32 0, %v61
    %v63 = vrot.slane %v58, %v62
    %v69 = vunpack.c.l.b16 %v54
    %v70 = vunpack.c.l.b16 %v55
    %v71 = vunpack.c.l.b16 %v56
    %v72 = vunpack.c.l.b16 %v57
    %v73 = vpack.c.b16 %v70, %v69
    %v74 = vpack.c.b16 %v72, %v71
    %vm77 = vcmask 261120
    %v79 = vsel %vm77, %v53, 0
    %81 = vmatprep.subr.bf16.mxu0 0
    %82 = vmatpush1.bf16.msra.mxu0 0
    %83 = vmatprep.subr.bf16.mxu0 0
    %84 = vmatpush1.bf16.msra.mxu0 0
    %85 = vmatprep.subr.bf16.mxu0 0
    %86 = vmatpush1.bf16.msra.mxu0 0
    %87 = vmatprep.subr.bf16.mxu0 0
    %88 = vmatpush1.bf16.msra.mxu0 0
    %89 = vmatprep.subr.bf16.mxu0 0
    %90 = vmatpush1.bf16.msra.mxu0 0
    %91 = vmatprep.subr.bf16.mxu0 0
    %92 = vmatpush1.bf16.msra.mxu0 0
    %93 = vmatprep.subr.bf16.mxu0 0
    %94 = vmatpush1.bf16.msra.mxu0 %v74
    %95 = vmatprep.subr.bf16.mxu0 0
    %96 = vmatpush1.bf16.msra.mxu0 %v73
    %97 = vmatprep.subr.bf16.mxu0 0
    %98 = vmatpush2.bf16.msra.mxu0 0
    %99 = vmatprep.subr.bf16.mxu0 0
    %100 = vmatpush2.bf16.msra.mxu0 0
    %101 = vmatprep.subr.bf16.mxu0 0
    %102 = vmatpush2.bf16.msra.mxu0 0
    %103 = vmatprep.subr.bf16.mxu0 0
    %104 = vmatpush2.bf16.msra.mxu0 0
    %105 = vmatprep.subr.bf16.mxu0 0
    %106 = vmatpush2.bf16.msra.mxu0 0
    %107 = vmatprep.subr.bf16.mxu0 0
    %108 = vmatpush2.bf16.msra.mxu0 0
    %109 = vmatprep.subr.bf16.mxu0 0
    %110 = vmatpush2.bf16.msra.mxu0 0
    %111 = vmatprep.subr.bf16.mxu0 0
    %112 = vmatpush2.bf16.msra.mxu0 0
    %113 = vmatprep.mubr.bf16.mxu0 0
    %114 = vmatmul.mubr.bf16.gmra.mxu0 %v79
    %v115 = vpop.f32.mrf.mxu0
    %v116 = vadd.f32 %v63, %v115
    %v117 = vpop.f32.mrf.mxu0
    %v118 = vpop.f32.mrf.mxu0
    %v119 = vadd.f32 %v63, %v118
    %v120 = vpop.f32.mrf.mxu0
    %121 = vdwg.mxu0
    %vm122 = vcmp.gt.f32.partialorder %v116, 0.0
    %vm123 = vcmp.gt.f32.partialorder %v119, 0.0
    %v124 = vmul.f32 %v116, 0.01
    %v125 = vmul.f32 %v119, 0.01
    %v126 = vsel %vm122, %v116, %v124
    %v127 = vsel %vm123, %v119, %v125
    %v128 = vld [vmem:[%s3] sm:$0x1]
    %v130 = vlaneseq
    %v131 = vshrl.u32 %v130, 7
    %v132 = vsub.s32 0, %v131
    %v133 = vrot.slane %v128, %v132
    %v135 = vmul.f32 %v126, %v133
    %v136 = vmul.f32 %v127, %v133
    %v137 = vsel %vm77, %v135, 0.0
    %138 = vadd.xlane.f32.xlu0 %v137
    %v139 = vpop.xlane.xlu0 %138
    %v140 = vsel %vm77, %v136, 0.0
    %141 = vadd.xlane.f32.xlu0 %v140
    %v142 = vpop.xlane.xlu0 %141
    %s143 = sld [smem:[#allocation2]]
    %v144 = vstv %s143
    %v145 = vadd.f32 %v139, %v144
    %v146 = vadd.f32 %v142, %v144
    %v149 = vlaneseq
    %v150 = vand.u32 %v149, 127
    %v151 = vlaneseq
    %v152 = vshrl.u32 %v151, 7
    %v153 = vsub.s32 %v150, %v152
    %v154 = vrot.slane %v145, %v153
    %v155 = vadd.s32 %v150, 4294967288
    %v156 = vlaneseq
    %v157 = vshrl.u32 %v156, 7
    %v158 = vsub.s32 %v155, %v157
    %v159 = vrot.slane %v146, %v158
    %vm160 = vcmask 130112
    %v161 = vsel %vm160, %v159, %v154
    %vm163 = vcmask 122880
    %164 = vst.msk [vmem:[#allocation8] sm:$0x1] %vm163, %v161
    // Predicated region
    $region30: #{tpu_custom_call.1} parent=1 // pred_check
      _
    $region31: #{tpu_custom_call.1} parent=1 // pred_check_branch
      %166 = sbr.rel (0) target = $region33
    $region32: #{tpu_custom_call.1} parent=1 // pred_region
      %s168 = ssub.s32 16, 16
      %169 = vsyncadd [#allocation5], %s168
      %s171 = sshll.u32 [#allocation8], 4
      %s172 = int_to_ptr.vmem [resolvable:$true] %s171
      %174 = dma.vmem_to_hbm [thread:$0]  %s172, 16, %s5, [#allocation5]
    $region33: #{tpu_custom_call.1} parent=1 // pred_fallthru
      _
    // Predicated region
    $region34: #{tpu_custom_call.1} parent=1 // pred_check
      _
    $region35: #{tpu_custom_call.1} parent=1 // pred_check_branch
      %176 = sbr.rel (0) target = $region37
    $region36: #{tpu_custom_call.1} parent=1 // pred_region
      %177 = dma.done [#allocation5], 16
    $region37: #{tpu_custom_call.1} parent=1 // pred_fallthru
      _
    %178 = vsyncpa [#allocation4], 1
    %179 = vsyncpa [#allocation7], 1
    %180 = vsyncpa [#allocation5], 1

</llo_original>
